<compile_context>
chip_gen: v5e
topology: v5e:2x2
jax: 0.10.0
libtpu: 0.0.40
codegen_flags: <defaults>
</compile_context>

<pallas_src>
import functools

import jax
import jax.numpy as jnp
from jax.experimental import pallas as pl
from jax.experimental.pallas import tpu as pltpu

BN_EPS = 1e-5
NEG_SLOPE = 0.2
LANE = 128
NCORES = 2                # leading "parallel" axis: v7x megacore split; serial elsewhere
MAX_TILE_ROWS = 2048


def _round_up(v, m):
    return ((v + m - 1) // m) * m


def _vmem_budget_bytes():
    cap = 64 * 1024 * 1024                     # conservative fallback (v7x per-TC VMEM)
    try:
        info = pltpu.get_tpu_info()
        cap = int(getattr(info, "vmem_capacity_bytes", cap))
    except Exception:
        pass
    return (3 * cap) // 4                      # leave headroom under physical VMEM


def _pick_tile(rows_needed, bytes_per_row, budget_bytes, cap_rows):
    """Largest power-of-two row tile (>=8) whose pipelined footprint fits the budget."""
    cap = min(cap_rows, pl.next_power_of_2(max(int(rows_needed), 8)))
    t = 8
    while t * 2 <= cap and (t * 2) * bytes_per_row <= budget_bytes:
        t *= 2
    return t


# --------------------------------------------------------------------------- pass 1
# z = x @ [w1 | ws] + [b1 | bs]; write h1 / r tiles; accumulate per-core column stats.
def _pass1_kernel(x_ref, wa_ref, ba_ref, h1_ref, r_ref, zsum_ref, zsq_ref,
                  *, n_valid, rows_per_core, hp):
    c = pl.program_id(0)
    i = pl.program_id(1)
    tb = x_ref.shape[0]

    @pl.when(i == 0)
    def _():
        zsum_ref[...] = jnp.zeros_like(zsum_ref)
        zsq_ref[...] = jnp.zeros_like(zsq_ref)

    # fused (fc1 | shortcut) matmul: x goes through the MXU once per tile, f32 accumulation
    z = jnp.dot(x_ref[...], wa_ref[...], preferred_element_type=jnp.float32) + ba_ref[...]
    h1_ref[...] = z[:, :hp].astype(h1_ref.dtype)
    r_ref[...] = z[:, hp:].astype(r_ref.dtype)

    row0 = c * rows_per_core + i * tb
    has_pad = row0 + tb > n_valid

    @pl.when(jnp.logical_not(has_pad))          # fast path: no padded rows in this tile
    def _():
        zsum_ref[...] += jnp.sum(z, axis=0, keepdims=True).reshape(zsum_ref.shape)
        zsq_ref[...] += jnp.sum(z * z, axis=0, keepdims=True).reshape(zsq_ref.shape)

    @pl.when(has_pad)                           # only tail tiles pay for the row mask
    def _():
        row = jax.lax.broadcasted_iota(jnp.int32, (tb, 1), 0) + row0
        valid = (row < n_valid).astype(jnp.float32)
        zv = z * valid
        zsum_ref[...] += jnp.sum(zv, axis=0, keepdims=True).reshape(zsum_ref.shape)
        zsq_ref[...] += jnp.sum(zv * z, axis=0, keepdims=True).reshape(zsq_ref.shape)


# --------------------------------------------------------------------------- pass 2
# bn1 (precomputed affine) -> LeakyReLU -> fc2; write o tiles; accumulate o column stats.
def _pass2_kernel(h1_ref, s1_ref, t1_ref, w2_ref, b2_ref,
                  o_ref, osum_ref, osq_ref, *, n_valid, rows_per_core, matmul_dtype):
    c = pl.program_id(0)
    i = pl.program_id(1)
    tb = h1_ref.shape[0]

    @pl.when(i == 0)
    def _():
        osum_ref[...] = jnp.zeros_like(osum_ref)
        osq_ref[...] = jnp.zeros_like(osq_ref)

    h = h1_ref[...].astype(jnp.float32) * s1_ref[...] + t1_ref[...]     # bn1 as one FMA
    a = jnp.where(h > 0, h, NEG_SLOPE * h)                              # LeakyReLU(0.2)
    o = jnp.dot(a.astype(matmul_dtype), w2_ref[...],
                preferred_element_type=jnp.float32) + b2_ref[...]
    o_ref[...] = o.astype(o_ref.dtype)

    row0 = c * rows_per_core + i * tb
    has_pad = row0 + tb > n_valid

    @pl.when(jnp.logical_not(has_pad))
    def _():
        osum_ref[...] += jnp.sum(o, axis=0, keepdims=True).reshape(osum_ref.shape)
        osq_ref[...] += jnp.sum(o * o, axis=0, keepdims=True).reshape(osq_ref.shape)

    @pl.when(has_pad)
    def _():
        row = jax.lax.broadcasted_iota(jnp.int32, (tb, 1), 0) + row0
        valid = (row < n_valid).astype(jnp.float32)
        ov = o * valid
        osum_ref[...] += jnp.sum(ov, axis=0, keepdims=True).reshape(osum_ref.shape)
        osq_ref[...] += jnp.sum(ov * o, axis=0, keepdims=True).reshape(osq_ref.shape)


# --------------------------------------------------------------------------- pass 3
# y = LeakyReLU(o * s2 + r * ss + c0) — pure elementwise, fully parallel, 5 input refs.
def _pass3_kernel(o_ref, r_ref, s2_ref, ss_ref, c0_ref, y_ref):
    s = (o_ref[...].astype(jnp.float32) * s2_ref[...]
         + r_ref[...].astype(jnp.float32) * ss_ref[...] + c0_ref[...])
    y_ref[...] = jnp.where(s > 0, s, NEG_SLOPE * s)


# --------------------------------------------------------------------------- wrapper
def residual_block(x, params, *,
                   matmul_dtype=jnp.bfloat16,
                   intermediate_dtype=jnp.float32,
                   max_tile_rows=MAX_TILE_ROWS):
    """Training-mode ResidualBlock forward (full-batch BatchNorm statistics)."""
    n, in_f = x.shape
    hid_f = params["w1"].shape[1]
    out_f = params["w2"].shape[1]
    identity_shortcut = "ws" not in params
    if identity_shortcut and in_f != out_f:
        raise ValueError("identity shortcut requires in_features == out_features")

    ip = _round_up(in_f, LANE)
    hp = _round_up(hid_f, LANE)
    op = _round_up(out_f, LANE)
    cf = hp + op

    f32 = jnp.float32
    b_mm = jnp.dtype(matmul_dtype).itemsize
    b_im = jnp.dtype(intermediate_dtype).itemsize

    vmem_budget = _vmem_budget_bytes()
    slack = 4 * 1024 * 1024
    # single-buffered constants per grid step, and double-buffered bytes per batch row
    const1 = ip * cf * b_mm + 3 * cf * 4
    const2 = hp * op * b_mm + (2 * hp + 3 * op) * 4
    const3 = 3 * op * 4
    row1 = 2 * (ip * b_mm + hp * b_im + op * b_im)
    row2 = 2 * (hp * b_im + op * b_im)
    row3 = 2 * (2 * op * b_im + op * 4)

    rows_per_core_min = pl.cdiv(n, NCORES)
    tb1 = _pick_tile(rows_per_core_min, row1, max(vmem_budget - const1 - slack, 8 * row1), max_tile_rows)
    tb2 = _pick_tile(rows_per_core_min, row2, max(vmem_budget - const2 - slack, 8 * row2), max_tile_rows)
    tb3 = _pick_tile(rows_per_core_min, row3, max(vmem_budget - const3 - slack, 8 * row3), max_tile_rows)
    rows_per_core = _round_up(max(rows_per_core_min, 8), max(tb1, tb2, tb3))
    n_pad = NCORES * rows_per_core

    def pad2(a, rows, cols, dtype=f32):
        a = jnp.asarray(a, f32)
        return jnp.pad(a, ((0, rows - a.shape[0]), (0, cols - a.shape[1]))).astype(dtype)

    x_p = pad2(x, n_pad, ip, matmul_dtype)      # pre-cast in HBM: half the x DMA traffic

    if identity_shortcut:
        ws = jnp.zeros((ip, op), matmul_dtype)  # unused columns (residual = x fed to pass 3)
        bs = jnp.zeros((1, op), f32)
    else:
        ws = pad2(params["ws"], ip, op, matmul_dtype)
        bs = pad2(params["bs"], 1, op)

    wa = jnp.concatenate([pad2(params["w1"], ip, hp, matmul_dtype), ws], axis=1)
    ba = jnp.concatenate([pad2(params["b1"], 1, hp), bs], axis=1)
    w2 = pad2(params["w2"], hp, op, matmul_dtype)
    b2 = pad2(params["b2"], 1, op)
    g1, be1 = pad2(params["g1"], 1, hp), pad2(params["be1"], 1, hp)
    g2, be2 = pad2(params["g2"], 1, op), pad2(params["be2"], 1, op)

    cp_mm = pltpu.CompilerParams(dimension_semantics=("parallel", "arbitrary"),
                                 vmem_limit_bytes=vmem_budget)
    cp_ew = pltpu.CompilerParams(dimension_semantics=("parallel",),
                                 vmem_limit_bytes=vmem_budget)
    buf1 = pl.Buffered(1)     # constant-index inputs: drop the useless second buffer

    def row_spec(tb, cols, bpc):
        def imap(c, i):
            return (c * bpc + i, 0)
        return pl.BlockSpec((tb, cols), imap)

    def const_spec2(rows, cols):   # constants on the 2-D (core, tile) grids
        return pl.BlockSpec((rows, cols), lambda c, i: (0, 0), pipeline_mode=buf1)

    def const_spec1(rows, cols):   # constants on the 1-D elementwise grid
        return pl.BlockSpec((rows, cols), lambda i: (0, 0), pipeline_mode=buf1)

    def stat_spec(cols):           # per-core resident stat accumulator block
        return pl.BlockSpec((1, 1, cols), lambda c, i: (c, 0, 0))

    # ---- pass 1: fused x-side matmul + per-core column stats of [h1 | r] -------------
    bpc1 = rows_per_core // tb1
    h1, r, zsum, zsq = pl.pallas_call(
        functools.partial(_pass1_kernel, n_valid=n, rows_per_core=rows_per_core, hp=hp),
        out_shape=(jax.ShapeDtypeStruct((n_pad, hp), intermediate_dtype),
                   jax.ShapeDtypeStruct((n_pad, op), intermediate_dtype),
                   jax.ShapeDtypeStruct((NCORES, 1, cf), f32),
                   jax.ShapeDtypeStruct((NCORES, 1, cf), f32)),
        grid=(NCORES, bpc1),
        in_specs=[row_spec(tb1, ip, bpc1), const_spec2(ip, cf), const_spec2(1, cf)],
        out_specs=(row_spec(tb1, hp, bpc1), row_spec(tb1, op, bpc1),
                   stat_spec(cf), stat_spec(cf)),
        compiler_params=cp_mm,
    )(x_p, wa, ba)

    # full-batch BN statistics -> affine vectors (tiny (1, C) math, plain JAX)
    inv_n = 1.0 / float(n)
    zsum, zsq = jnp.sum(zsum, axis=0), jnp.sum(zsq, axis=0)
    mean_z = zsum * inv_n
    # TODO(synk): single-pass E[x^2]-E[x]^2 can cancel for strongly off-center columns;
    # f32 accumulation + clamp is adequate here, a two-pass/Welford variant would be safer.
    var_z = jnp.maximum(zsq * inv_n - mean_z * mean_z, 0.0)
    s1 = g1 * jax.lax.rsqrt(var_z[:, :hp] + BN_EPS)
    t1 = be1 - mean_z[:, :hp] * s1
    if identity_shortcut:
        ss_v = jnp.ones((1, op), f32)
        ts_v = jnp.zeros((1, op), f32)
        r_in = pad2(x, n_pad, op)                 # exact residual, no BN, no matmul rounding
    else:
        gs, bes = pad2(params["gs"], 1, op), pad2(params["bes"], 1, op)
        ss_v = gs * jax.lax.rsqrt(var_z[:, hp:] + BN_EPS)
        ts_v = bes - mean_z[:, hp:] * ss_v
        r_in = r

    # ---- pass 2: bn1 -> LeakyReLU -> fc2 + per-core column stats of o ----------------
    bpc2 = rows_per_core // tb2
    o, osum, osq = pl.pallas_call(
        functools.partial(_pass2_kernel, n_valid=n, rows_per_core=rows_per_core,
                          matmul_dtype=matmul_dtype),
        out_shape=(jax.ShapeDtypeStruct((n_pad, op), intermediate_dtype),
                   jax.ShapeDtypeStruct((NCORES, 1, op), f32),
                   jax.ShapeDtypeStruct((NCORES, 1, op), f32)),
        grid=(NCORES, bpc2),
        in_specs=[row_spec(tb2, hp, bpc2),
                  const_spec2(1, hp), const_spec2(1, hp),
                  const_spec2(hp, op), const_spec2(1, op)],
        out_specs=(row_spec(tb2, op, bpc2), stat_spec(op), stat_spec(op)),
        compiler_params=cp_mm,
    )(h1, s1, t1, w2, b2)

    osum, osq = jnp.sum(osum, axis=0), jnp.sum(osq, axis=0)
    mean_o = osum * inv_n
    var_o = jnp.maximum(osq * inv_n - mean_o * mean_o, 0.0)
    s2 = g2 * jax.lax.rsqrt(var_o + BN_EPS)
    c0 = (be2 - mean_o * s2) + ts_v

    # ---- pass 3: fused bn2 + shortcut + residual add + LeakyReLU ----------------------
    y = pl.pallas_call(
        _pass3_kernel,
        out_shape=jax.ShapeDtypeStruct((n_pad, op), f32),
        grid=(n_pad // tb3,),
        in_specs=[pl.BlockSpec((tb3, op), lambda i: (i, 0)),
                  pl.BlockSpec((tb3, op), lambda i: (i, 0)),
                  const_spec1(1, op), const_spec1(1, op), const_spec1(1, op)],
        out_specs=pl.BlockSpec((tb3, op), lambda i: (i, 0)),
        compiler_params=cp_ew,
    )(o, r_in, s2, ss_v, c0)

    return y[:n, :out_f]


# --------------------------------------------------------------------------- init / ref
def init_params(key, in_features, hidden_features, out_features):
    """PyTorch-style Linear init: uniform(-1/sqrt(fan_in), 1/sqrt(fan_in))."""
    def linear(k, fan_in, fan_out):
        k_w, k_b = jax.random.split(k)
        bound = 1.0 / jnp.sqrt(fan_in)
        w = jax.random.uniform(k_w, (fan_in, fan_out), jnp.float32, -bound, bound)
        b = jax.random.uniform(k_b, (1, fan_out), jnp.float32, -bound, bound)
        return w, b

    k1, k2, k3 = jax.random.split(key, 3)
    w1, b1 = linear(k1, in_features, hidden_features)
    w2, b2 = linear(k2, hidden_features, out_features)
    p = dict(
        w1=w1, b1=b1,
        g1=jnp.ones((1, hidden_features), jnp.float32),
        be1=jnp.zeros((1, hidden_features), jnp.float32),
        w2=w2, b2=b2,
        g2=jnp.ones((1, out_features), jnp.float32),
        be2=jnp.zeros((1, out_features), jnp.float32),
    )
    if in_features != out_features:           # Linear + BN shortcut, else Identity
        ws, bs = linear(k3, in_features, out_features)
        p.update(ws=ws, bs=bs,
                 gs=jnp.ones((1, out_features), jnp.float32),
                 bes=jnp.zeros((1, out_features), jnp.float32))
    return p


def residual_block_ref(x, p, matmul_dtype=jnp.float32):
    """Pure-JAX reference (training-mode BatchNorm1d, biased variance)."""
    def mm(a, w, b):
        return jnp.dot(a.astype(matmul_dtype), w.astype(matmul_dtype),
                       preferred_element_type=jnp.float32) + b

    def bn(h, g, b):
        mean = jnp.mean(h, axis=0, keepdims=True)
        var = jnp.mean((h - mean) ** 2, axis=0, keepdims=True)
        return (h - mean) / jnp.sqrt(var + BN_EPS) * g + b

    def act(h):
        return jnp.where(h > 0, h, NEG_SLOPE * h)

    if "ws" in p:
        r = bn(mm(x, p["ws"], p["bs"]), p["gs"], p["bes"])
    else:
        r = x
    h = act(bn(mm(x, p["w1"], p["b1"]), p["g1"], p["be1"]))
    o = bn(mm(h, p["w2"], p["b2"]), p["g2"], p["be2"])
    return act(o + r)


if __name__ == "__main__":
    key = jax.random.PRNGKey(0)
    k_x, k_p, k_p2 = jax.random.split(key, 3)

    # --- Linear + BN shortcut branch (in_features != out_features) ---
    in_f, hid_f, out_f = 16, 32, 8
    batch = 20                      # not a tile multiple -> exercises masked BN statistics
    x = jax.random.normal(k_x, (batch, in_f), jnp.float32)
    params = init_params(k_p, in_f, hid_f, out_f)
    ref = residual_block_ref(x, params)

    # 1) exact-f32 MXU path with tiny tiles (multi-tile stat accumulation), tight check
    out_f32 = jax.block_until_ready(
        residual_block(x, params, matmul_dtype=jnp.float32, max_tile_rows=8))
    assert out_f32.shape == (batch, out_f)
    assert jnp.allclose(out_f32, ref, atol=5e-4, rtol=5e-4), "f32 mismatch vs reference"

    # 2) default perf config (bf16 MXU operands, f32 accumulation / BN math);
    #    compare against a reference that uses the same bf16 matmul inputs.
    out_bf16 = jax.block_until_ready(residual_block(x, params))
    ref_bf16 = residual_block_ref(x, params, matmul_dtype=jnp.bfloat16)
    assert jnp.allclose(out_bf16, ref_bf16, atol=1e-2, rtol=1e-2), "bf16 mismatch vs reference"

    # --- Identity-shortcut branch (in_features == out_features) ---
    x2 = jax.random.normal(k_x, (batch, out_f), jnp.float32)
    params_id = init_params(k_p2, out_f, hid_f, out_f)
    out_id = jax.block_until_ready(
        residual_block(x2, params_id, matmul_dtype=jnp.float32))
    ref_id = residual_block_ref(x2, params_id)
    assert jnp.allclose(out_id, ref_id, atol=5e-4, rtol=5e-4), "identity-shortcut mismatch"

    print("KERNEL_OK")
</pallas_src>

<mosaic_0001>
module attributes {stable_mosaic.version = 11 : i64} {
  func.func @_pass1_kernel(%arg0: i32, %arg1: i32, %arg2: memref<8x128xf32, #tpu.memory_space<vmem>>, %arg3: memref<128x256xf32, #tpu.memory_space<vmem>>, %arg4: memref<1x256xf32, #tpu.memory_space<vmem>>, %arg5: memref<8x128xf32, #tpu.memory_space<vmem>>, %arg6: memref<8x128xf32, #tpu.memory_space<vmem>>, %arg7: memref<1x1x256xf32, #tpu.memory_space<vmem>>, %arg8: memref<1x1x256xf32, #tpu.memory_space<vmem>>) attributes {dimension_semantics = [#tpu.dimension_semantics<parallel>, #tpu.dimension_semantics<arbitrary>], iteration_bounds = array<i64: 2, 2>, scalar_prefetch = 0 : i64, scratch_operands = 0 : i64, tpu.core_type = #tpu.core_type<tc>, window_params = [{transform_indices = @transform_0, window_bounds = array<i64: 8, 128>}, {pipeline_mode = #tpu.pipeline_mode<synchronous>, transform_indices = @transform_1, window_bounds = array<i64: 128, 256>}, {pipeline_mode = #tpu.pipeline_mode<synchronous>, transform_indices = @transform_2, window_bounds = array<i64: 1, 256>}, {transform_indices = @transform_3, window_bounds = array<i64: 8, 128>}, {transform_indices = @transform_4, window_bounds = array<i64: 8, 128>}, {transform_indices = @transform_5, window_bounds = array<i64: 1, 1, 256>}, {transform_indices = @transform_6, window_bounds = array<i64: 1, 1, 256>}]} {
    %c0_i32 = arith.constant 0 : i32
    %0 = arith.cmpi eq, %arg1, %c0_i32 : i32
    %1 = arith.extui %0 : i1 to i32
    %c0_i32_0 = arith.constant 0 : i32
    %2 = arith.cmpi ne, %1, %c0_i32_0 : i32
    scf.if %2 {
      %cst_13 = arith.constant 0.000000e+00 : f32
      %23 = vector.broadcast %cst_13 : f32 to vector<1x1x256xf32>
      %c0_14 = arith.constant 0 : index
      %c0_15 = arith.constant 0 : index
      %c0_16 = arith.constant 0 : index
      %24 = vector.load %arg7[%c0_14, %c0_15, %c0_16] : memref<1x1x256xf32, #tpu.memory_space<vmem>>, vector<1x1x256xf32>
      tpu.vector_store %arg7[%c0_14, %c0_15, %c0_16], %23 {strides = array<i32>} : memref<1x1x256xf32, #tpu.memory_space<vmem>>, vector<1x1x256xf32>,
      %cst_17 = arith.constant 0.000000e+00 : f32
      %25 = vector.broadcast %cst_17 : f32 to vector<1x1x256xf32>
      %c0_18 = arith.constant 0 : index
      %c0_19 = arith.constant 0 : index
      %c0_20 = arith.constant 0 : index
      %26 = vector.load %arg8[%c0_18, %c0_19, %c0_20] : memref<1x1x256xf32, #tpu.memory_space<vmem>>, vector<1x1x256xf32>
      tpu.vector_store %arg8[%c0_18, %c0_19, %c0_20], %25 {strides = array<i32>} : memref<1x1x256xf32, #tpu.memory_space<vmem>>, vector<1x1x256xf32>,
    } else {
    }
    %c0 = arith.constant 0 : index
    %c0_1 = arith.constant 0 : index
    %3 = vector.load %arg2[%c0, %c0_1] : memref<8x128xf32, #tpu.memory_space<vmem>>, vector<8x128xf32>
    %c0_2 = arith.constant 0 : index
    %c0_3 = arith.constant 0 : index
    %4 = vector.load %arg3[%c0_2, %c0_3] : memref<128x256xf32, #tpu.memory_space<vmem>>, vector<128x256xf32>
    %cst = arith.constant dense<0.000000e+00> : vector<8x256xf32>
    %5 = tpu.matmul %3, %4, %cst {dimension_numbers = #tpu.dot_dimension_numbers<[1], [0], [0], [1], [0, 0, 1, 1], [], []>} : vector<8x128xf32>, vector<128x256xf32>, vector<8x256xf32> -> vector<8x256xf32>
    %c0_4 = arith.constant 0 : index
    %c0_5 = arith.constant 0 : index
    %6 = vector.load %arg4[%c0_4, %c0_5] : memref<1x256xf32, #tpu.memory_space<vmem>>, vector<1x256xf32>
    %7 = vector.broadcast %6 : vector<1x256xf32> to vector<8x256xf32>
    %8 = arith.addf %5, %7 : vector<8x256xf32>
    %9 = vector.extract_strided_slice %8 {offsets = [0, 0], sizes = [8, 128], strides = [1, 1]} : vector<8x256xf32> to vector<8x128xf32>
    %c0_6 = arith.constant 0 : index
    %c0_7 = arith.constant 0 : index
    %10 = vector.load %arg5[%c0_6, %c0_7] : memref<8x128xf32, #tpu.memory_space<vmem>>, vector<8x128xf32>
    tpu.vector_store %arg5[%c0_6, %c0_7], %9 {strides = array<i32>} : memref<8x128xf32, #tpu.memory_space<vmem>>, vector<8x128xf32>,
    %11 = vector.extract_strided_slice %8 {offsets = [0, 128], sizes = [8, 128], strides = [1, 1]} : vector<8x256xf32> to vector<8x128xf32>
    %c0_8 = arith.constant 0 : index
    %c0_9 = arith.constant 0 : index
    %12 = vector.load %arg6[%c0_8, %c0_9] : memref<8x128xf32, #tpu.memory_space<vmem>>, vector<8x128xf32>
    tpu.vector_store %arg6[%c0_8, %c0_9], %11 {strides = array<i32>} : memref<8x128xf32, #tpu.memory_space<vmem>>, vector<8x128xf32>,
    %c16_i32 = arith.constant 16 : i32
    %13 = arith.muli %arg0, %c16_i32 : i32
    %c8_i32 = arith.constant 8 : i32
    %14 = arith.muli %arg1, %c8_i32 : i32
    %15 = arith.addi %13, %14 : i32
    %c8_i32_10 = arith.constant 8 : i32
    %16 = arith.addi %15, %c8_i32_10 : i32
    %c20_i32 = arith.constant 20 : i32
    %17 = arith.cmpi sgt, %16, %c20_i32 : i32
    %true = arith.constant true
    %18 = arith.xori %17, %true : i1
    %19 = arith.extui %18 : i1 to i32
    %c0_i32_11 = arith.constant 0 : i32
    %20 = arith.cmpi ne, %19, %c0_i32_11 : i32
    scf.if %20 {
      %c0_13 = arith.constant 0 : index
      %c0_14 = arith.constant 0 : index
      %c0_15 = arith.constant 0 : index
      %23 = vector.load %arg7[%c0_13, %c0_14, %c0_15] : memref<1x1x256xf32, #tpu.memory_space<vmem>>, vector<1x1x256xf32>
      %cst_16 = arith.constant dense<0.000000e+00> : vector<256xf32>
      %24 = vector.multi_reduction <add>, %8, %cst_16 [0] : vector<8x256xf32> to vector<256xf32>
      %25 = vector.shape_cast %24 : vector<256xf32> to vector<1x256xf32>
      %26 = vector.shape_cast %25 : vector<1x256xf32> to vector<1x1x256xf32>
      %27 = arith.addf %23, %26 : vector<1x1x256xf32>
      %c0_17 = arith.constant 0 : index
      %c0_18 = arith.constant 0 : index
      %c0_19 = arith.constant 0 : index
      %28 = vector.load %arg7[%c0_17, %c0_18, %c0_19] : memref<1x1x256xf32, #tpu.memory_space<vmem>>, vector<1x1x256xf32>
      tpu.vector_store %arg7[%c0_17, %c0_18, %c0_19], %27 {strides = array<i32>} : memref<1x1x256xf32, #tpu.memory_space<vmem>>, vector<1x1x256xf32>,
      %c0_20 = arith.constant 0 : index
      %c0_21 = arith.constant 0 : index
      %c0_22 = arith.constant 0 : index
      %29 = vector.load %arg8[%c0_20, %c0_21, %c0_22] : memref<1x1x256xf32, #tpu.memory_space<vmem>>, vector<1x1x256xf32>
      %30 = arith.mulf %8, %8 : vector<8x256xf32>
      %cst_23 = arith.constant dense<0.000000e+00> : vector<256xf32>
      %31 = vector.multi_reduction <add>, %30, %cst_23 [0] : vector<8x256xf32> to vector<256xf32>
      %32 = vector.shape_cast %31 : vector<256xf32> to vector<1x256xf32>
      %33 = vector.shape_cast %32 : vector<1x256xf32> to vector<1x1x256xf32>
      %34 = arith.addf %29, %33 : vector<1x1x256xf32>
      %c0_24 = arith.constant 0 : index
      %c0_25 = arith.constant 0 : index
      %c0_26 = arith.constant 0 : index
      %35 = vector.load %arg8[%c0_24, %c0_25, %c0_26] : memref<1x1x256xf32, #tpu.memory_space<vmem>>, vector<1x1x256xf32>
      tpu.vector_store %arg8[%c0_24, %c0_25, %c0_26], %34 {strides = array<i32>} : memref<1x1x256xf32, #tpu.memory_space<vmem>>, vector<1x1x256xf32>,
    } else {
    }
    %21 = arith.extui %17 : i1 to i32
    %c0_i32_12 = arith.constant 0 : i32
    %22 = arith.cmpi ne, %21, %c0_i32_12 : i32
    scf.if %22 {
      %23 = tpu.iota {dimensions = array<i32: 0>} : vector<8x1xi32>
      %24 = vector.broadcast %15 : i32 to vector<8x1xi32>
      %25 = arith.addi %23, %24 : vector<8x1xi32>
      %c20_i32_13 = arith.constant 20 : i32
      %26 = vector.broadcast %c20_i32_13 : i32 to vector<8x1xi32>
      %27 = arith.cmpi slt, %25, %26 : vector<8x1xi32>
      %28 = arith.extui %27 : vector<8x1xi1> to vector<8x1xi32>
      %29 = arith.sitofp %28 : vector<8x1xi32> to vector<8x1xf32>
      %30 = vector.broadcast %29 : vector<8x1xf32> to vector<8x256xf32>
      %31 = arith.mulf %8, %30 : vector<8x256xf32>
      %c0_14 = arith.constant 0 : index
      %c0_15 = arith.constant 0 : index
      %c0_16 = arith.constant 0 : index
      %32 = vector.load %arg7[%c0_14, %c0_15, %c0_16] : memref<1x1x256xf32, #tpu.memory_space<vmem>>, vector<1x1x256xf32>
      %cst_17 = arith.constant dense<0.000000e+00> : vector<256xf32>
      %33 = vector.multi_reduction <add>, %31, %cst_17 [0] : vector<8x256xf32> to vector<256xf32>
      %34 = vector.shape_cast %33 : vector<256xf32> to vector<1x256xf32>
      %35 = vector.shape_cast %34 : vector<1x256xf32> to vector<1x1x256xf32>
      %36 = arith.addf %32, %35 : vector<1x1x256xf32>
      %c0_18 = arith.constant 0 : index
      %c0_19 = arith.constant 0 : index
      %c0_20 = arith.constant 0 : index
      %37 = vector.load %arg7[%c0_18, %c0_19, %c0_20] : memref<1x1x256xf32, #tpu.memory_space<vmem>>, vector<1x1x256xf32>
      tpu.vector_store %arg7[%c0_18, %c0_19, %c0_20], %36 {strides = array<i32>} : memref<1x1x256xf32, #tpu.memory_space<vmem>>, vector<1x1x256xf32>,
      %c0_21 = arith.constant 0 : index
      %c0_22 = arith.constant 0 : index
      %c0_23 = arith.constant 0 : index
      %38 = vector.load %arg8[%c0_21, %c0_22, %c0_23] : memref<1x1x256xf32, #tpu.memory_space<vmem>>, vector<1x1x256xf32>
      %39 = arith.mulf %31, %8 : vector<8x256xf32>
      %cst_24 = arith.constant dense<0.000000e+00> : vector<256xf32>
      %40 = vector.multi_reduction <add>, %39, %cst_24 [0] : vector<8x256xf32> to vector<256xf32>
      %41 = vector.shape_cast %40 : vector<256xf32> to vector<1x256xf32>
      %42 = vector.shape_cast %41 : vector<1x256xf32> to vector<1x1x256xf32>
      %43 = arith.addf %38, %42 : vector<1x1x256xf32>
      %c0_25 = arith.constant 0 : index
      %c0_26 = arith.constant 0 : index
      %c0_27 = arith.constant 0 : index
      %44 = vector.load %arg8[%c0_25, %c0_26, %c0_27] : memref<1x1x256xf32, #tpu.memory_space<vmem>>, vector<1x1x256xf32>
      tpu.vector_store %arg8[%c0_25, %c0_26, %c0_27], %43 {strides = array<i32>} : memref<1x1x256xf32, #tpu.memory_space<vmem>>, vector<1x1x256xf32>,
    } else {
    }
    return
  }
  func.func @transform_0(%arg0: i32, %arg1: i32) -> (i32, i32) {
    %c2_i32 = arith.constant 2 : i32
    %0 = arith.muli %arg0, %c2_i32 : i32
    %1 = arith.addi %0, %arg1 : i32
    %c0_i32 = arith.constant 0 : i32
    %c0_i32_0 = arith.constant 0 : i32
    return %1, %c0_i32 : i32, i32
  }
  func.func @transform_1(%arg0: i32, %arg1: i32) -> (i32, i32) {
    %c0_i32 = arith.constant 0 : i32
    %c0_i32_0 = arith.constant 0 : i32
    %c0_i32_1 = arith.constant 0 : i32
    return %c0_i32, %c0_i32_0 : i32, i32
  }
  func.func @transform_2(%arg0: i32, %arg1: i32) -> (i32, i32) {
    %c0_i32 = arith.constant 0 : i32
    %c0_i32_0 = arith.constant 0 : i32
    %c0_i32_1 = arith.constant 0 : i32
    return %c0_i32, %c0_i32_0 : i32, i32
  }
  func.func @transform_3(%arg0: i32, %arg1: i32) -> (i32, i32) {
    %c2_i32 = arith.constant 2 : i32
    %0 = arith.muli %arg0, %c2_i32 : i32
    %1 = arith.addi %0, %arg1 : i32
    %c0_i32 = arith.constant 0 : i32
    %c0_i32_0 = arith.constant 0 : i32
    return %1, %c0_i32 : i32, i32
  }
  func.func @transform_4(%arg0: i32, %arg1: i32) -> (i32, i32) {
    %c2_i32 = arith.constant 2 : i32
    %0 = arith.muli %arg0, %c2_i32 : i32
    %1 = arith.addi %0, %arg1 : i32
    %c0_i32 = arith.constant 0 : i32
    %c0_i32_0 = arith.constant 0 : i32
    return %1, %c0_i32 : i32, i32
  }
  func.func @transform_5(%arg0: i32, %arg1: i32) -> (i32, i32, i32) {
    %c0_i32 = arith.constant 0 : i32
    %c0_i32_0 = arith.constant 0 : i32
    %c0_i32_1 = arith.constant 0 : i32
    return %arg0, %c0_i32, %c0_i32_0 : i32, i32, i32
  }
  func.func @transform_6(%arg0: i32, %arg1: i32) -> (i32, i32, i32) {
    %c0_i32 = arith.constant 0 : i32
    %c0_i32_0 = arith.constant 0 : i32
    %c0_i32_1 = arith.constant 0 : i32
    return %arg0, %c0_i32, %c0_i32_0 : i32, i32, i32
  }
}

</mosaic_0001>

<llo_original>
// kernel: tpu_custom_call.1
$region0: #{tpu_custom_call.1}
  #allocation0 [shape = 'u32[]', space=smem, size = 0x4, offset = 0x4, fixed_abs, tag = 'smem constant byte address 0x4 - core index']
  #allocation1 [shape = 'u32[72,128]{1,0:T(1,128)}', space=vmem, size = 0x9000, scoped, tag = 'internal scratch']
  %s0 = inlined_call_operand.hbm [shape: f32[32,128], index: 0, kind: input, shape index: {}]
  %s1 = inlined_call_operand.hbm [shape: f32[128,256], index: 1, kind: input, shape index: {}]
  %s2 = inlined_call_operand.hbm [shape: f32[1,256], index: 2, kind: input, shape index: {}]
  %s3 = inlined_call_operand.hbm [shape: f32[32,128], index: 3, kind: output, shape index: {0}]
  %s4 = inlined_call_operand.hbm [shape: f32[32,128], index: 4, kind: output, shape index: {1}]
  %s5 = inlined_call_operand.hbm [shape: f32[2,1,256], index: 5, kind: output, shape index: {2}]
  %s6 = inlined_call_operand.hbm [shape: f32[2,1,256], index: 6, kind: output, shape index: {3}]
  %7 = xla_tuple %s3, %s4, %s5, %s6
  %s8 = sld [smem:[#allocation0]]
  $region93: #{tpu_custom_call.1} parent=0
    _
  %s10 = ssub.s32 1, %s8
  %s11 = scalar_select 0, %s10, %s8
  $region1: #{tpu_custom_call.1} parent=0
    #allocation2 [shape = 'u8[8192]{0}', space=vmem, size = 0x2000, scoped, tag = 'input window, operand 0']
    #allocation3 [shape = 's32[2]{0}', space=sflag, size = 0x8, scoped, tag = 'scoped memory for tpu_custom_call.1']
    #allocation4 [shape = 's32[2]{0}', space=sflag, size = 0x8, scoped, tag = 'scoped memory for tpu_custom_call.1']
    #allocation5 [shape = 'u8[131072]{0}', space=vmem, size = 0x20000, scoped, tag = 'input window, operand 1, single buffered']
    #allocation6 [shape = 's32[1]{0}', space=sflag, size = 0x4, scoped, tag = 'scoped memory for tpu_custom_call.1']
    #allocation7 [shape = 'u8[1024]{0}', space=vmem, size = 0x400, scoped, tag = 'input window, operand 2, single buffered']
    #allocation8 [shape = 'u8[8192]{0}', space=vmem, size = 0x2000, scoped, tag = 'output window, operand 0']
    #allocation9 [shape = 'u8[8192]{0}', space=vmem, size = 0x2000, scoped, tag = 'output window, operand 1']
    #allocation10 [shape = 's32[2]{0}', space=sflag, size = 0x8, scoped, tag = 'scoped memory for tpu_custom_call.1']
    #allocation11 [shape = 'u8[2048]{0}', space=vmem, size = 0x800, scoped, tag = 'output window, operand 2']
    #allocation12 [shape = 'u8[2048]{0}', space=vmem, size = 0x800, scoped, tag = 'output window, operand 3']
    #allocation13 [shape = 's32[2]{0}', space=sflag, size = 0x8, scoped, tag = 'scoped memory for tpu_custom_call.1']
    %12 = vsyncpa [#allocation3], 0
    %s13 = scalar_lea.sflag [#allocation3], 1
    %14 = vsyncpa %s13, 0
    %15 = vsyncpa [#allocation6], 0
    %16 = vsyncpa [#allocation4], 0
    %s17 = scalar_lea.sflag [#allocation4], 1
    %18 = vsyncpa %s17, 0
    %19 = vsyncpa [#allocation10], 0
    %s20 = scalar_lea.sflag [#allocation10], 1
    %21 = vsyncpa %s20, 0
    %22 = vsyncpa [#allocation13], 0
    %s23 = scalar_lea.sflag [#allocation13], 1
    %24 = vsyncpa %s23, 0
    loop: start=0, step=1, limit=6
    $region2: #{tpu_custom_call.1} parent=1 // loop_pre_header
      _
    $region3: #{tpu_custom_call.1} parent=1 // loop_header
      %s26 = sphi 0, %s30
      %p27 = scmp.ge.s32.totalorder %s26, 6
      %s33 = sphi 0, %s45
      %s34 = sphi 0, %s41
      %s35 = sphi 0, %s33
      %s36 = sphi 0, %s34
      %s37 = sphi 0, %s35
      %s38 = sphi 0, %s36
      %s52 = sphi 0, %s54
      %s55 = sphi 0, %s52
      %s56 = sphi 0, %s55
      %s72 = sphi 0, %s56
      %s76 = sphi 0, %s76
      %s78 = sphi 0, %s76
      %s79 = sphi 0, %s78
      %s93 = sphi 0, %s79
      %s97 = sphi 0, %s97
      %s99 = sphi 0, %s97
      %s100 = sphi 0, %s99
      %s114 = sphi 0, %s100
      %s124 = sphi 0, %s126
      %s127 = sphi 0, %s124
      %s128 = sphi 0, %s127
      %s144 = sphi 0, %s128
      %s154 = sphi 0, %s156
      %s157 = sphi 0, %s154
      %s158 = sphi 0, %s157
      %s174 = sphi 0, %s158
      %s180 = sphi 0, %s182
      %s183 = sphi 0, %s180
      %s184 = sphi 0, %s183
      %s200 = sphi 0, %s184
      %s206 = sphi 0, %s208
      %s209 = sphi 0, %s206
      %s210 = sphi 0, %s209
      %s226 = sphi 0, %s210
    $region4: #{tpu_custom_call.1} parent=1 // loop_header_branch
      %29 = sbr.rel (%p27) target = $region8
    $region5: #{tpu_custom_call.1} parent=1 // loop_body
      %s31 = ssub.s32 %s26, 1
      %s32 = ssub.s32 %s26, 2
      %s39 = sadd.s32 1, %s34
      %p40 = scmp.ge.s32.totalorder %s39, 2
      %s41 = scalar_select %p40, 0, %s39
      %s42 = sadd.s32 1, %s33
      %s43 = scalar_select %p40, %s42, %s33
      %p44 = scmp.ge.s32.totalorder %s43, 2
      %s45 = scalar_select %p44, 0, %s43
      %s46 = smul.u32 %s33, 2
      %s47 = sadd.s32 %s46, %s34
      %s48 = smul.u32 %s45, 2
      %s49 = sadd.s32 %s48, %s41
      %s50 = ssub.s32 %s47, %s49
      %p51 = scmp.eq.s32.totalorder %s50, 0
      %s53 = sadd.s32 %s52, 1
      %s54 = scalar_select %p51, %s52, %s53
      %p57 = pneg %p51
      %p58 = scmp.eq.s32.totalorder %s26, 3
      %p59 = por %p57, %p58
      %p60 = scmp.ne.s32.totalorder %s52, %s55
      %p61 = scmp.eq.s32.totalorder %s26, 0
      %p62 = por %p60, %p61
      %p63 = scmp.ne.s32.totalorder %s52, %s55
      %p64 = scmp.eq.s32.totalorder %s31, 3
      %p65 = por %p63, %p64
      %p66 = scmp.ne.s32.totalorder %s55, %s56
      %p67 = scmp.eq.s32.totalorder %s31, 0
      %p68 = por %p66, %p67
      %p69 = scmp.ne.s32.totalorder %s55, %s56
      %p70 = scmp.eq.s32.totalorder %s32, 3
      %p71 = por %p69, %p70
      %p73 = scmp.ne.s32.totalorder %s56, %s72
      %p74 = scmp.eq.s32.totalorder %s32, 0
      %p75 = por %p73, %p74
      %s77 = sadd.s32 %s76, 1
      %p80 = scmp.eq.s32.totalorder %s26, 3
      %p81 = scmp.ne.s32.totalorder %s76, %s78
      %p82 = scmp.eq.s32.totalorder %s26, 0
      %p83 = por %p81, %p82
      %p84 = scmp.ne.s32.totalorder %s76, %s78
      %p85 = scmp.eq.s32.totalorder %s31, 3
      %p86 = por %p84, %p85
      %p87 = scmp.ne.s32.totalorder %s78, %s79
      %p88 = scmp.eq.s32.totalorder %s31, 0
      %p89 = por %p87, %p88
      %p90 = scmp.ne.s32.totalorder %s78, %s79
      %p91 = scmp.eq.s32.totalorder %s32, 3
      %p92 = por %p90, %p91
      %p94 = scmp.ne.s32.totalorder %s79, %s93
      %p95 = scmp.eq.s32.totalorder %s32, 0
      %p96 = por %p94, %p95
      %s98 = sadd.s32 %s97, 1
      %p101 = scmp.eq.s32.totalorder %s26, 3
      %p102 = scmp.ne.s32.totalorder %s97, %s99
      %p103 = scmp.eq.s32.totalorder %s26, 0
      %p104 = por %p102, %p103
      %p105 = scmp.ne.s32.totalorder %s97, %s99
      %p106 = scmp.eq.s32.totalorder %s31, 3
      %p107 = por %p105, %p106
      %p108 = scmp.ne.s32.totalorder %s99, %s100
      %p109 = scmp.eq.s32.totalorder %s31, 0
      %p110 = por %p108, %p109
      %p111 = scmp.ne.s32.totalorder %s99, %s100
      %p112 = scmp.eq.s32.totalorder %s32, 3
      %p113 = por %p111, %p112
      %p115 = scmp.ne.s32.totalorder %s100, %s114
      %p116 = scmp.eq.s32.totalorder %s32, 0
      %p117 = por %p115, %p116
      %s118 = smul.u32 %s33, 2
      %s119 = sadd.s32 %s118, %s34
      %s120 = smul.u32 %s45, 2
      %s121 = sadd.s32 %s120, %s41
      %s122 = ssub.s32 %s119, %s121
      %p123 = scmp.eq.s32.totalorder %s122, 0
      %s125 = sadd.s32 %s124, 1
      %s126 = scalar_select %p123, %s124, %s125
      %p129 = pneg %p123
      %p130 = scmp.eq.s32.totalorder %s26, 3
      %p131 = por %p129, %p130
      %p132 = scmp.ne.s32.totalorder %s124, %s127
      %p133 = scmp.eq.s32.totalorder %s26, 0
      %p134 = por %p132, %p133
      %p135 = scmp.ne.s32.totalorder %s124, %s127
      %p136 = scmp.eq.s32.totalorder %s31, 3
      %p137 = por %p135, %p136
      %p138 = scmp.ne.s32.totalorder %s127, %s128
      %p139 = scmp.eq.s32.totalorder %s31, 0
      %p140 = por %p138, %p139
      %p141 = scmp.ne.s32.totalorder %s127, %s128
      %p142 = scmp.eq.s32.totalorder %s32, 3
      %p143 = por %p141, %p142
      %p145 = scmp.ne.s32.totalorder %s128, %s144
      %p146 = scmp.eq.s32.totalorder %s32, 0
      %p147 = por %p145, %p146
      %s148 = smul.u32 %s33, 2
      %s149 = sadd.s32 %s148, %s34
      %s150 = smul.u32 %s45, 2
      %s151 = sadd.s32 %s150, %s41
      %s152 = ssub.s32 %s149, %s151
      %p153 = scmp.eq.s32.totalorder %s152, 0
      %s155 = sadd.s32 %s154, 1
      %s156 = scalar_select %p153, %s154, %s155
      %p159 = pneg %p153
      %p160 = scmp.eq.s32.totalorder %s26, 3
      %p161 = por %p159, %p160
      %p162 = scmp.ne.s32.totalorder %s154, %s157
      %p163 = scmp.eq.s32.totalorder %s26, 0
      %p164 = por %p162, %p163
      %p165 = scmp.ne.s32.totalorder %s154, %s157
      %p166 = scmp.eq.s32.totalorder %s31, 3
      %p167 = por %p165, %p166
      %p168 = scmp.ne.s32.totalorder %s157, %s158
      %p169 = scmp.eq.s32.totalorder %s31, 0
      %p170 = por %p168, %p169
      %p171 = scmp.ne.s32.totalorder %s157, %s158
      %p172 = scmp.eq.s32.totalorder %s32, 3
      %p173 = por %p171, %p172
      %p175 = scmp.ne.s32.totalorder %s158, %s174
      %p176 = scmp.eq.s32.totalorder %s32, 0
      %p177 = por %p175, %p176
      %s178 = ssub.s32 %s33, %s45
      %p179 = scmp.eq.s32.totalorder %s178, 0
      %s181 = sadd.s32 %s180, 1
      %s182 = scalar_select %p179, %s180, %s181
      %p185 = pneg %p179
      %p186 = scmp.eq.s32.totalorder %s26, 3
      %p187 = por %p185, %p186
      %p188 = scmp.ne.s32.totalorder %s180, %s183
      %p189 = scmp.eq.s32.totalorder %s26, 0
      %p190 = por %p188, %p189
      %p191 = scmp.ne.s32.totalorder %s180, %s183
      %p192 = scmp.eq.s32.totalorder %s31, 3
      %p193 = por %p191, %p192
      %p194 = scmp.ne.s32.totalorder %s183, %s184
      %p195 = scmp.eq.s32.totalorder %s31, 0
      %p196 = por %p194, %p195
      %p197 = scmp.ne.s32.totalorder %s183, %s184
      %p198 = scmp.eq.s32.totalorder %s32, 3
      %p199 = por %p197, %p198
      %p201 = scmp.ne.s32.totalorder %s184, %s200
      %p202 = scmp.eq.s32.totalorder %s32, 0
      %p203 = por %p201, %p202
      %s204 = ssub.s32 %s33, %s45
      %p205 = scmp.eq.s32.totalorder %s204, 0
      %s207 = sadd.s32 %s206, 1
      %s208 = scalar_select %p205, %s206, %s207
      %p211 = pneg %p205
      %p212 = scmp.eq.s32.totalorder %s26, 3
      %p213 = por %p211, %p212
      %p214 = scmp.ne.s32.totalorder %s206, %s209
      %p215 = scmp.eq.s32.totalorder %s26, 0
      %p216 = por %p214, %p215
      %p217 = scmp.ne.s32.totalorder %s206, %s209
      %p218 = scmp.eq.s32.totalorder %s31, 3
      %p219 = por %p217, %p218
      %p220 = scmp.ne.s32.totalorder %s209, %s210
      %p221 = scmp.eq.s32.totalorder %s31, 0
      %p222 = por %p220, %p221
      %p223 = scmp.ne.s32.totalorder %s209, %s210
      %p224 = scmp.eq.s32.totalorder %s32, 3
      %p225 = por %p223, %p224
      %p227 = scmp.ne.s32.totalorder %s210, %s226
      %p228 = scmp.eq.s32.totalorder %s32, 0
      %p229 = por %p227, %p228
      %p230 = scmp.le.s32.totalorder 1, %s26
      %p231 = scmp.lt.s32.totalorder %s26, 5
      %p232 = pnand %p230, %p231
      %p233 = pneg %p232
      // Predicated region
      $region9: #{tpu_custom_call.1} parent=5 // pred_check
        _
      $region10: #{tpu_custom_call.1} parent=5 // pred_check_branch
        %235 = sbr.rel (%p232) target = $region12
      $region11: #{tpu_custom_call.1} parent=5 // pred_region
        %s236 = ssub.s32 %s26, 1
        // Predicated region
        $region13: #{tpu_custom_call.1} parent=11 // pred_check
          %p237 = pneg %p89
        $region14: #{tpu_custom_call.1} parent=11 // pred_check_branch
          %239 = sbr.rel (%p237) target = $region16
        $region15: #{tpu_custom_call.1} parent=11 // pred_region
          %241 = vsyncadd [#allocation6], 0
          %s242 = sshll.u32 %s1, 4
          %s243 = int_to_ptr.hbm [resolvable:$true] %s242
          %s244 = sshll.u32 [#allocation5], 4
          %s245 = int_to_ptr.vmem [resolvable:$true] %s244
          %250 = dma.hbm_to_vmem [thread:$0]  %s243, 4096, %s245, [#allocation6], 256, 256, 16
        $region16: #{tpu_custom_call.1} parent=11 // pred_fallthru
          _
        // Predicated region
        $region17: #{tpu_custom_call.1} parent=11 // pred_check
          %p251 = pneg %p110
        $region18: #{tpu_custom_call.1} parent=11 // pred_check_branch
          %253 = sbr.rel (%p251) target = $region20
        $region19: #{tpu_custom_call.1} parent=11 // pred_region
          %255 = vsyncadd [#allocation6], 0
          %s257 = sshll.u32 %s2, 4
          %s258 = int_to_ptr.hbm [resolvable:$true] %s257
          %s259 = sshll.u32 [#allocation7], 4
          %s260 = int_to_ptr.vmem [resolvable:$true] %s259
          %262 = dma.hbm_to_vmem [thread:$0]  %s258, 32, %s260, [#allocation6]
        $region20: #{tpu_custom_call.1} parent=11 // pred_fallthru
          _
      $region12: #{tpu_custom_call.1} parent=5 // pred_fallthru
        _
      %p263 = scmp.lt.s32.totalorder %s26, 4
      // Predicated region
      $region21: #{tpu_custom_call.1} parent=5 // pred_check
        %p264 = pneg %p263
      $region22: #{tpu_custom_call.1} parent=5 // pred_check_branch
        %266 = sbr.rel (%p264) target = $region24
      $region23: #{tpu_custom_call.1} parent=5 // pred_region
        // Predicated region
        $region25: #{tpu_custom_call.1} parent=23 // pred_check
          %p267 = pneg %p62
        $region26: #{tpu_custom_call.1} parent=23 // pred_check_branch
          %269 = sbr.rel (%p267) target = $region28
        $region27: #{tpu_custom_call.1} parent=23 // pred_region
          %s270 = sand.u32 %s52, 1
          %s271 = scalar_lea.sflag [#allocation3], %s270
          %s272 = sand.u32 %s52, 1
          %s273 = smul.addr %s272, 8
          %s274 = scalar_lea.vmem [#allocation2], %s273
          %s275 = smul.u32 %s33, 2
          %s276 = sadd.s32 %s275, %s34
          %278 = vsyncadd %s271, 0
          %s279 = smul.addr %s276, 8
          %s280 = scalar_lea.hbm %s0, %s279
          %s282 = sshll.u32 %s280, 4
          %s283 = int_to_ptr.hbm [resolvable:$true] %s282
          %s284 = sshll.u32 %s274, 4
          %s285 = int_to_ptr.vmem [resolvable:$true] %s284
          %287 = dma.hbm_to_vmem [thread:$0]  %s283, 128, %s285, %s271
        $region28: #{tpu_custom_call.1} parent=23 // pred_fallthru
          _
      $region24: #{tpu_custom_call.1} parent=5 // pred_fallthru
        _
      %p288 = scmp.le.s32.totalorder 1, %s26
      %p289 = scmp.lt.s32.totalorder %s26, 5
      %p290 = pnand %p288, %p289
      %p291 = pneg %p290
      // Predicated region
      $region29: #{tpu_custom_call.1} parent=5 // pred_check
        _
      $region30: #{tpu_custom_call.1} parent=5 // pred_check_branch
        %293 = sbr.rel (%p290) target = $region32
      $region31: #{tpu_custom_call.1} parent=5 // pred_region
        %s294 = ssub.s32 %s26, 1
        %s295 = sand.u32 %s55, 1
        %s296 = scalar_lea.sflag [#allocation3], %s295
        %s297 = sand.u32 %s55, 1
        %s298 = smul.addr %s297, 8
        %s299 = scalar_lea.vmem [#allocation2], %s298
        // Predicated region
        $region33: #{tpu_custom_call.1} parent=31 // pred_check
          %p300 = pneg %p68
        $region34: #{tpu_custom_call.1} parent=31 // pred_check_branch
          %302 = sbr.rel (%p300) target = $region36
        $region35: #{tpu_custom_call.1} parent=31 // pred_region
          %304 = dma.done %s296, 128
        $region36: #{tpu_custom_call.1} parent=31 // pred_fallthru
          _
        // Predicated region
        $region37: #{tpu_custom_call.1} parent=31 // pred_check
          %p305 = pneg %p89
        $region38: #{tpu_custom_call.1} parent=31 // pred_check_branch
          %307 = sbr.rel (%p305) target = $region40
        $region39: #{tpu_custom_call.1} parent=31 // pred_region
          %309 = dma.done [#allocation6], 4096
        $region40: #{tpu_custom_call.1} parent=31 // pred_fallthru
          _
        // Predicated region
        $region41: #{tpu_custom_call.1} parent=31 // pred_check
          %p310 = pneg %p110
        $region42: #{tpu_custom_call.1} parent=31 // pred_check_branch
          %312 = sbr.rel (%p310) target = $region44
        $region43: #{tpu_custom_call.1} parent=31 // pred_region
          %314 = dma.done [#allocation6], 32
        $region44: #{tpu_custom_call.1} parent=31 // pred_fallthru
          _
        %s315 = sand.u32 %s55, 1
        %s316 = scalar_lea.sflag [#allocation3], %s315
        %s317 = sand.u32 %s55, 1
        %s318 = smul.addr %s317, 8
        %s319 = scalar_lea.vmem [#allocation2], %s318
        %p320 = pneg %p68
        %p321 = pneg %p65
        %p322 = pneg %p89
        %p323 = pneg %p86
        %p324 = pneg %p110
        %p325 = pneg %p107
        %p326 = pneg %p140
        %p327 = pneg %p137
        %s328 = sand.u32 %s127, 1
        %s329 = scalar_lea.sflag [#allocation4], %s328
        %s330 = sand.u32 %s127, 1
        %s331 = smul.addr %s330, 8
        %s332 = scalar_lea.vmem [#allocation8], %s331
        %p333 = pneg %p170
        %p334 = pneg %p167
        %s335 = sand.u32 %s31, 1
        %s336 = scalar_lea.sflag [#allocation10], %s335
        %s337 = sand.u32 %s157, 1
        %s338 = smul.addr %s337, 8
        %s339 = scalar_lea.vmem [#allocation9], %s338
        %p340 = pneg %p196
        %p341 = pneg %p193
        %s342 = sand.u32 %s31, 1
        %s343 = scalar_lea.sflag [#allocation10], %s342
        %s344 = sand.u32 %s183, 1
        %s345 = smul.addr %s344, 2
        %s346 = scalar_lea.vmem [#allocation11], %s345
        %p347 = pneg %p222
        %p348 = pneg %p219
        %s349 = sand.u32 %s209, 1
        %s350 = scalar_lea.sflag [#allocation13], %s349
        %s351 = sand.u32 %s209, 1
        %s352 = smul.addr %s351, 2
        %s353 = scalar_lea.vmem [#allocation12], %s352
        %s354 = smul.u32 %s35, 2
        %s355 = sadd.s32 %s354, %s36
        %s356 = smul.u32 %s35, 2
        %s357 = sadd.s32 %s356, %s36
        %s358 = smul.u32 %s35, 2
        %s359 = sadd.s32 %s358, %s36
        %p360 = scmp.eq.s32.totalorder %s36, 0
        // Predicated region
        $region45: #{tpu_custom_call.1} parent=31 // pred_check
          %p361 = pneg %p360
        $region46: #{tpu_custom_call.1} parent=31 // pred_check_branch
          %363 = sbr.rel (%p361) target = $region48
        $region47: #{tpu_custom_call.1} parent=31 // pred_region
          %v364 = vlaneseq
          %vm365 = vcmp.ge.s32.totalorder %v364, 0
          %vm366 = vcmp.lt.s32.totalorder %v364, 256
          %vm367 = vmand %vm365, %vm366
          %368 = vst.msk [vmem:[%s346] sm:$0x3] %vm367, 0.0
          %369 = vst.msk [vmem:[%s353] sm:$0x3] %vm367, 0.0
        $region48: #{tpu_custom_call.1} parent=31 // pred_fallthru
          _
        %v370 = vld [vmem:[%s299] sm:$0xff]
        %v371 = vld [vmem:[#allocation5] sm:$0xff]
        %v372 = vld [vmem:[#allocation5 + $0x8] sm:$0xff]
        %v373 = vld [vmem:[#allocation5 + $0x10] sm:$0xff]
        %v374 = vld [vmem:[#allocation5 + $0x18] sm:$0xff]
        %v375 = vld [vmem:[#allocation5 + $0x20] sm:$0xff]
        %v376 = vld [vmem:[#allocation5 + $0x28] sm:$0xff]
        %v377 = vld [vmem:[#allocation5 + $0x30] sm:$0xff]
        %v378 = vld [vmem:[#allocation5 + $0x38] sm:$0xff]
        %v379 = vld [vmem:[#allocation5 + $0x40] sm:$0xff]
        %v380 = vld [vmem:[#allocation5 + $0x48] sm:$0xff]
        %v381 = vld [vmem:[#allocation5 + $0x50] sm:$0xff]
        %v382 = vld [vmem:[#allocation5 + $0x58] sm:$0xff]
        %v383 = vld [vmem:[#allocation5 + $0x60] sm:$0xff]
        %v384 = vld [vmem:[#allocation5 + $0x68] sm:$0xff]
        %v385 = vld [vmem:[#allocation5 + $0x70] sm:$0xff]
        %v386 = vld [vmem:[#allocation5 + $0x78] sm:$0xff]
        %v387 = vld [vmem:[#allocation5 + $0x80] sm:$0xff]
        %v388 = vld [vmem:[#allocation5 + $0x88] sm:$0xff]
        %v389 = vld [vmem:[#allocation5 + $0x90] sm:$0xff]
        %v390 = vld [vmem:[#allocation5 + $0x98] sm:$0xff]
        %v391 = vld [vmem:[#allocation5 + $0xa0] sm:$0xff]
        %v392 = vld [vmem:[#allocation5 + $0xa8] sm:$0xff]
        %v393 = vld [vmem:[#allocation5 + $0xb0] sm:$0xff]
        %v394 = vld [vmem:[#allocation5 + $0xb8] sm:$0xff]
        %v395 = vld [vmem:[#allocation5 + $0xc0] sm:$0xff]
        %v396 = vld [vmem:[#allocation5 + $0xc8] sm:$0xff]
        %v397 = vld [vmem:[#allocation5 + $0xd0] sm:$0xff]
        %v398 = vld [vmem:[#allocation5 + $0xd8] sm:$0xff]
        %v399 = vld [vmem:[#allocation5 + $0xe0] sm:$0xff]
        %v400 = vld [vmem:[#allocation5 + $0xe8] sm:$0xff]
        %v401 = vld [vmem:[#allocation5 + $0xf0] sm:$0xff]
        %v402 = vld [vmem:[#allocation5 + $0xf8] sm:$0xff]
        %v403 = vld [vmem:[#allocation7] sm:$0x3]
        %v405 = vperm.slane %v403, 0
        %v406 = vperm.slane %v403, 1
        %409 = vmatpush.msra.mxu0 %v401
        %410 = vmatpush.msra.mxu0 %v399
        %411 = vmatpush.msra.mxu0 %v397
        %412 = vmatpush.msra.mxu0 %v395
        %413 = vmatpush.msra.mxu0 %v393
        %414 = vmatpush.msra.mxu0 %v391
        %415 = vmatpush.msra.mxu0 %v389
        %416 = vmatpush.msra.mxu0 %v387
        %417 = vmatpush.msra.mxu0 %v385
        %418 = vmatpush.msra.mxu0 %v383
        %419 = vmatpush.msra.mxu0 %v381
        %420 = vmatpush.msra.mxu0 %v379
        %421 = vmatpush.msra.mxu0 %v377
        %422 = vmatpush.msra.mxu0 %v375
        %423 = vmatpush.msra.mxu0 %v373
        %424 = vmatpush.msra.mxu0 %v371
        %425 = vmatmul.f32.gmra.mxu0 %v370
        %v426 = vpop.f32.mrf.mxu0
        %v427 = vadd.f32 %v405, %v426
        %428 = vdwg.mxu0
        %429 = vmatpush.msra.mxu0 %v402
        %430 = vmatpush.msra.mxu0 %v400
        %431 = vmatpush.msra.mxu0 %v398
        %432 = vmatpush.msra.mxu0 %v396
        %433 = vmatpush.msra.mxu0 %v394
        %434 = vmatpush.msra.mxu0 %v392
        %435 = vmatpush.msra.mxu0 %v390
        %436 = vmatpush.msra.mxu0 %v388
        %437 = vmatpush.msra.mxu0 %v386
        %438 = vmatpush.msra.mxu0 %v384
        %439 = vmatpush.msra.mxu0 %v382
        %440 = vmatpush.msra.mxu0 %v380
        %441 = vmatpush.msra.mxu0 %v378
        %442 = vmatpush.msra.mxu0 %v376
        %443 = vmatpush.msra.mxu0 %v374
        %444 = vmatpush.msra.mxu0 %v372
        %445 = vmatmul.f32.gmra.mxu0 %v370
        %v446 = vpop.f32.mrf.mxu0
        %v447 = vadd.f32 %v406, %v446
        %448 = vdwg.mxu0
        %449 = vst [vmem:[%s332] sm:$0xff] %v427
        %450 = vst [vmem:[%s339] sm:$0xff] %v447
        %s451 = smul.u32 %s35, 16
        %s452 = smul.u32 %s36, 8
        %s453 = sadd.s32 %s451, %s452
        %s454 = sadd.s32 %s453, 8
        %p455 = scmp.gt.s32.totalorder %s454, 20
        %p456 = scmp.le.s32.totalorder %s454, 20
        // Predicated region
        $region49: #{tpu_custom_call.1} parent=31 // pred_check
          %p457 = pneg %p456
        $region50: #{tpu_custom_call.1} parent=31 // pred_check_branch
          %459 = sbr.rel (%p457) target = $region52
        $region51: #{tpu_custom_call.1} parent=31 // pred_region
          %v460 = vld [vmem:[%s346] sm:$0x3]
          %v461 = vrot.slane %v427, 4
          %v462 = vadd.f32 %v427, %v461
          %v463 = vrot.slane %v462, 2
          %v464 = vadd.f32 %v462, %v463
          %v465 = vrot.slane %v464, 1
          %v466 = vadd.f32 %v464, %v465
          %v467 = vrot.slane %v447, 4
          %v468 = vadd.f32 %v447, %v467
          %v469 = vrot.slane %v468, 2
          %v470 = vadd.f32 %v468, %v469
          %v471 = vrot.slane %v470, 1
          %v472 = vadd.f32 %v470, %v471
          %v475 = vrot.slane %v472, 7
          %vm476 = vcmask 1040384
          %v477 = vsel %vm476, %v466, %v475
          %v479 = vadd.f32 %v460, %v477
          %v480 = vlaneseq
          %vm481 = vcmp.ge.s32.totalorder %v480, 0
          %vm482 = vcmp.lt.s32.totalorder %v480, 256
          %vm483 = vmand %vm481, %vm482
          %484 = vst.msk [vmem:[%s346] sm:$0x3] %vm483, %v479
          %v485 = vld [vmem:[%s353] sm:$0x3]
          %v486 = vmul.f32 %v427, %v427
          %v487 = vmul.f32 %v447, %v447
          %v488 = vrot.slane %v486, 4
          %v489 = vadd.f32 %v486, %v488
          %v490 = vrot.slane %v489, 2
          %v491 = vadd.f32 %v489, %v490
          %v492 = vrot.slane %v491, 1
          %v493 = vadd.f32 %v491, %v492
          %v494 = vrot.slane %v487, 4
          %v495 = vadd.f32 %v487, %v494
          %v496 = vrot.slane %v495, 2
          %v497 = vadd.f32 %v495, %v496
          %v498 = vrot.slane %v497, 1
          %v499 = vadd.f32 %v497, %v498
          %v502 = vrot.slane %v499, 7
          %v503 = vsel %vm476, %v493, %v502
          %v505 = vadd.f32 %v485, %v503
          %506 = vst.msk [vmem:[%s353] sm:$0x3] %vm483, %v505
        $region52: #{tpu_custom_call.1} parent=31 // pred_fallthru
          _
        // Predicated region
        $region53: #{tpu_custom_call.1} parent=31 // pred_check
          %p507 = pneg %p455
        $region54: #{tpu_custom_call.1} parent=31 // pred_check_branch
          %509 = sbr.rel (%p507) target = $region56
        $region55: #{tpu_custom_call.1} parent=31 // pred_region
          %v510 = vlaneseq
          %v511 = vshrl.u32 %v510, 7
          %v512 = vstv %s453
          %v513 = vadd.s32 %v511, %v512
          %vm514 = vcmp.lt.s32.totalorder %v513, 20
          %v515 = vsel %vm514, 1, 0
          %v516 = vcvt.s32.f32 %v515
          %v517 = vmul.f32 %v427, %v516
          %v518 = vmul.f32 %v447, %v516
          %v519 = vld [vmem:[%s346] sm:$0x3]
          %v520 = vrot.slane %v517, 4
          %v521 = vadd.f32 %v517, %v520
          %v522 = vrot.slane %v521, 2
          %v523 = vadd.f32 %v521, %v522
          %v524 = vrot.slane %v523, 1
          %v525 = vadd.f32 %v523, %v524
          %v526 = vrot.slane %v518, 4
          %v527 = vadd.f32 %v518, %v526
          %v528 = vrot.slane %v527, 2
          %v529 = vadd.f32 %v527, %v528
          %v530 = vrot.slane %v529, 1
          %v531 = vadd.f32 %v529, %v530
          %v534 = vrot.slane %v531, 7
          %vm535 = vcmask 1040384
          %v536 = vsel %vm535, %v525, %v534
          %v538 = vadd.f32 %v519, %v536
          %v539 = vlaneseq
          %vm540 = vcmp.ge.s32.totalorder %v539, 0
          %vm541 = vcmp.lt.s32.totalorder %v539, 256
          %vm542 = vmand %vm540, %vm541
          %543 = vst.msk [vmem:[%s346] sm:$0x3] %vm542, %v538
          %v544 = vld [vmem:[%s353] sm:$0x3]
          %v545 = vmul.f32 %v517, %v427
          %v546 = vmul.f32 %v518, %v447
          %v547 = vrot.slane %v545, 4
          %v548 = vadd.f32 %v545, %v547
          %v549 = vrot.slane %v548, 2
          %v550 = vadd.f32 %v548, %v549
          %v551 = vrot.slane %v550, 1
          %v552 = vadd.f32 %v550, %v551
          %v553 = vrot.slane %v546, 4
          %v554 = vadd.f32 %v546, %v553
          %v555 = vrot.slane %v554, 2
          %v556 = vadd.f32 %v554, %v555
          %v557 = vrot.slane %v556, 1
          %v558 = vadd.f32 %v556, %v557
          %v561 = vrot.slane %v558, 7
          %v562 = vsel %vm535, %v552, %v561
          %v564 = vadd.f32 %v544, %v562
          %565 = vst.msk [vmem:[%s353] sm:$0x3] %vm542, %v564
        $region56: #{tpu_custom_call.1} parent=31 // pred_fallthru
          _
        %s566 = sand.u32 %s127, 1
        %s567 = scalar_lea.sflag [#allocation4], %s566
        %s568 = sand.u32 %s127, 1
        %s569 = smul.addr %s568, 8
        %s570 = scalar_lea.vmem [#allocation8], %s569
        %s571 = sand.u32 %s31, 1
        %s572 = scalar_lea.sflag [#allocation10], %s571
        %s573 = sand.u32 %s157, 1
        %s574 = smul.addr %s573, 8
        %s575 = scalar_lea.vmem [#allocation9], %s574
        %s576 = sand.u32 %s31, 1
        %s577 = scalar_lea.sflag [#allocation10], %s576
        %s578 = sand.u32 %s183, 1
        %s579 = smul.addr %s578, 2
        %s580 = scalar_lea.vmem [#allocation11], %s579
        %s581 = sand.u32 %s209, 1
        %s582 = scalar_lea.sflag [#allocation13], %s581
        %s583 = sand.u32 %s209, 1
        %s584 = smul.addr %s583, 2
        %s585 = scalar_lea.vmem [#allocation12], %s584
        // Predicated region
        $region57: #{tpu_custom_call.1} parent=31 // pred_check
          %p586 = pneg %p137
        $region58: #{tpu_custom_call.1} parent=31 // pred_check_branch
          %588 = sbr.rel (%p586) target = $region60
        $region59: #{tpu_custom_call.1} parent=31 // pred_region
          %s589 = smul.u32 %s35, 2
          %s590 = sadd.s32 %s589, %s36
          %592 = vsyncadd %s567, 0
          %s593 = smul.addr %s590, 8
          %s594 = scalar_lea.hbm %s3, %s593
          %s596 = sshll.u32 %s570, 4
          %s597 = int_to_ptr.vmem [resolvable:$true] %s596
          %s598 = sshll.u32 %s594, 4
          %s599 = int_to_ptr.hbm [resolvable:$true] %s598
          %601 = dma.vmem_to_hbm [thread:$0]  %s597, 128, %s599, %s567
        $region60: #{tpu_custom_call.1} parent=31 // pred_fallthru
          _
        // Predicated region
        $region61: #{tpu_custom_call.1} parent=31 // pred_check
          %p602 = pneg %p167
        $region62: #{tpu_custom_call.1} parent=31 // pred_check_branch
          %604 = sbr.rel (%p602) target = $region64
        $region63: #{tpu_custom_call.1} parent=31 // pred_region
          %s605 = smul.u32 %s35, 2
          %s606 = sadd.s32 %s605, %s36
          %608 = vsyncadd %s572, 0
          %s609 = smul.addr %s606, 8
          %s610 = scalar_lea.hbm %s4, %s609
          %s612 = sshll.u32 %s575, 4
          %s613 = int_to_ptr.vmem [resolvable:$true] %s612
          %s614 = sshll.u32 %s610, 4
          %s615 = int_to_ptr.hbm [resolvable:$true] %s614
          %617 = dma.vmem_to_hbm [thread:$0]  %s613, 128, %s615, %s572
        $region64: #{tpu_custom_call.1} parent=31 // pred_fallthru
          _
        // Predicated region
        $region65: #{tpu_custom_call.1} parent=31 // pred_check
          %p618 = pneg %p193
        $region66: #{tpu_custom_call.1} parent=31 // pred_check_branch
          %620 = sbr.rel (%p618) target = $region68
        $region67: #{tpu_custom_call.1} parent=31 // pred_region
          %622 = vsyncadd %s577, 0
          %s623 = smul.addr %s35, 2
          %s624 = scalar_lea.hbm %s5, %s623
          %s626 = sshll.u32 %s580, 4
          %s627 = int_to_ptr.vmem [resolvable:$true] %s626
          %s628 = sshll.u32 %s624, 4
          %s629 = int_to_ptr.hbm [resolvable:$true] %s628
          %631 = dma.vmem_to_hbm [thread:$0]  %s627, 32, %s629, %s577
        $region68: #{tpu_custom_call.1} parent=31 // pred_fallthru
          _
        // Predicated region
        $region69: #{tpu_custom_call.1} parent=31 // pred_check
          %p632 = pneg %p219
        $region70: #{tpu_custom_call.1} parent=31 // pred_check_branch
          %634 = sbr.rel (%p632) target = $region72
        $region71: #{tpu_custom_call.1} parent=31 // pred_region
          %636 = vsyncadd %s582, 0
          %s637 = smul.addr %s35, 2
          %s638 = scalar_lea.hbm %s6, %s637
          %s640 = sshll.u32 %s585, 4
          %s641 = int_to_ptr.vmem [resolvable:$true] %s640
          %s642 = sshll.u32 %s638, 4
          %s643 = int_to_ptr.hbm [resolvable:$true] %s642
          %645 = dma.vmem_to_hbm [thread:$0]  %s641, 32, %s643, %s582
        $region72: #{tpu_custom_call.1} parent=31 // pred_fallthru
          _
      $region32: #{tpu_custom_call.1} parent=5 // pred_fallthru
        _
      %p646 = scmp.le.s32.totalorder 2, %s26
      // Predicated region
      $region73: #{tpu_custom_call.1} parent=5 // pred_check
        %p647 = pneg %p646
      $region74: #{tpu_custom_call.1} parent=5 // pred_check_branch
        %649 = sbr.rel (%p647) target = $region76
      $region75: #{tpu_custom_call.1} parent=5 // pred_region
        %s650 = ssub.s32 %s26, 2
        // Predicated region
        $region77: #{tpu_custom_call.1} parent=75 // pred_check
          %p651 = pneg %p143
        $region78: #{tpu_custom_call.1} parent=75 // pred_check_branch
          %653 = sbr.rel (%p651) target = $region80
        $region79: #{tpu_custom_call.1} parent=75 // pred_region
          %s654 = sand.u32 %s128, 1
          %s655 = scalar_lea.sflag [#allocation4], %s654
          %s656 = sand.u32 %s128, 1
          %s657 = smul.addr %s656, 8
          %s658 = scalar_lea.vmem [#allocation8], %s657
          %660 = dma.done %s655, 128
        $region80: #{tpu_custom_call.1} parent=75 // pred_fallthru
          _
        // Predicated region
        $region81: #{tpu_custom_call.1} parent=75 // pred_check
          %p661 = pneg %p173
        $region82: #{tpu_custom_call.1} parent=75 // pred_check_branch
          %663 = sbr.rel (%p661) target = $region84
        $region83: #{tpu_custom_call.1} parent=75 // pred_region
          %s664 = sand.u32 %s32, 1
          %s665 = scalar_lea.sflag [#allocation10], %s664
          %s666 = sand.u32 %s158, 1
          %s667 = smul.addr %s666, 8
          %s668 = scalar_lea.vmem [#allocation9], %s667
          %670 = dma.done %s665, 128
        $region84: #{tpu_custom_call.1} parent=75 // pred_fallthru
          _
        // Predicated region
        $region85: #{tpu_custom_call.1} parent=75 // pred_check
          %p671 = pneg %p199
        $region86: #{tpu_custom_call.1} parent=75 // pred_check_branch
          %673 = sbr.rel (%p671) target = $region88
        $region87: #{tpu_custom_call.1} parent=75 // pred_region
          %s674 = sand.u32 %s32, 1
          %s675 = scalar_lea.sflag [#allocation10], %s674
          %s676 = sand.u32 %s184, 1
          %s677 = smul.addr %s676, 2
          %s678 = scalar_lea.vmem [#allocation11], %s677
          %680 = dma.done %s675, 32
        $region88: #{tpu_custom_call.1} parent=75 // pred_fallthru
          _
        // Predicated region
        $region89: #{tpu_custom_call.1} parent=75 // pred_check
          %p681 = pneg %p225
        $region90: #{tpu_custom_call.1} parent=75 // pred_check_branch
          %683 = sbr.rel (%p681) target = $region92
        $region91: #{tpu_custom_call.1} parent=75 // pred_region
          %s684 = sand.u32 %s210, 1
          %s685 = scalar_lea.sflag [#allocation13], %s684
          %s686 = sand.u32 %s210, 1
          %s687 = smul.addr %s686, 2
          %s688 = scalar_lea.vmem [#allocation12], %s687
          %690 = dma.done %s685, 32
        $region92: #{tpu_custom_call.1} parent=75 // pred_fallthru
          _
      $region76: #{tpu_custom_call.1} parent=5 // pred_fallthru
        _
    $region6: #{tpu_custom_call.1} parent=1 // loop_footer
      %s30 = sadd.s32 1, %s26
    $region7: #{tpu_custom_call.1} parent=1 // loop_footer_branch
      %25 = sbr.rel target = $region3
    $region8: #{tpu_custom_call.1} parent=1 // loop_exit
      _
    %691 = vsyncpa [#allocation3], 1
    %s692 = scalar_lea.sflag [#allocation3], 1
    %693 = vsyncpa %s692, 1
    %694 = vsyncpa [#allocation6], 1
    %695 = vsyncpa [#allocation4], 1
    %s696 = scalar_lea.sflag [#allocation4], 1
    %697 = vsyncpa %s696, 1
    %698 = vsyncpa [#allocation10], 1
    %s699 = scalar_lea.sflag [#allocation10], 1
    %700 = vsyncpa %s699, 1
    %701 = vsyncpa [#allocation13], 1
    %s702 = scalar_lea.sflag [#allocation13], 1
    %703 = vsyncpa %s702, 1

</llo_original>
